<compile_context>
chip_gen: v7x
topology: tpu7x:2x2x1
jax: 0.10.0
libtpu: 0.0.40
codegen_flags: <defaults>
</compile_context>

<pallas_src>
import functools
import math

import jax
import jax.numpy as jnp
import numpy as np
from jax.experimental import pallas as pl
from jax.experimental.pallas import tpu as pltpu


def _round_up(x, m):
    return ((x + m - 1) // m) * m


# ----------------------------- Pallas kernel ------------------------------- #
def attention_block_kernel(x_ref, p_ref, packed_ref, *,
                           B, Tq, Tk, H, O, Dmax, r_bp, r_wo, r_bo):
    lane = packed_ref.shape[-1]

    # Fused block-diagonal projection of [queries ; keys|values] — one MXU op.
    wp = p_ref[0:Dmax, :]                         # (Dmax, lane); cols >= 3H are 0
    bp = p_ref[r_bp:r_bp + 1, :]                  # (1, lane)
    F = jnp.dot(x_ref[...], wp, preferred_element_type=jnp.float32) + bp

    # Output-projection weight (pre-scaled by 1/sqrt(Tk)); columns >= O are
    # zero, so ctx @ wo directly yields the lane-dense packed row prefix.
    wo = p_ref[r_wo:r_wo + H, :]                  # (H, lane)
    # bias broadcast hoisted out of the unrolled batch loop
    bo = jnp.broadcast_to(p_ref[r_bo:r_bo + 1, :], (Tq, lane))

    nq = B * Tq
    for b in range(B):                            # B is tiny -> static unroll
        Qb = F[b * Tq:(b + 1) * Tq, 0:H]                       # (Tq, H)
        Kb = F[nq + b * Tk:nq + (b + 1) * Tk, H:2 * H]         # (Tk, H)
        Vb = F[nq + b * Tk:nq + (b + 1) * Tk, 2 * H:3 * H]     # (Tk, H)

        # scores = Q @ K^T expressed as a last-dim contraction (no transpose).
        s = jax.lax.dot_general(Qb, Kb, (((1,), (1,)), ((), ())),
                                preferred_element_type=jnp.float32)  # (Tq, Tk)

        # softmax over keys (attention dropout is identity in eval mode).
        s = s - jnp.max(s, axis=-1, keepdims=True)
        e = jnp.exp(s)
        # approx=False: vrcp's ~6e-5 relative error is too close to 1e-4 rtol.
        attn = e * pl.reciprocal(jnp.sum(e, axis=-1, keepdims=True),
                                 approx=False)                       # (Tq, Tk)

        ctx = jnp.dot(attn, Vb, preferred_element_type=jnp.float32)  # (Tq, H)
        out_full = jnp.dot(ctx, wo, preferred_element_type=jnp.float32) + bo

        # [ out | 0 ... ] full-lane store (also zero-fills the pad region),
        # then one masked sub-range store for attn at lanes [O : O+Tk).
        packed_ref[b] = out_full
        packed_ref[b, :, O:O + Tk] = attn


# ------------------------------ glue / wrapper ------------------------------ #
def make_positional_encoding(max_length, dim, w):
    """Reproduces PositionalEncoding (auto=False) exactly.

    seed[i, j] = i / 10000 ** (2*(j//2)/dim)
    pe[0::2]   = sin(seed[0::2] * w)   # even *time positions*
    pe[1::2]   = cos(seed[1::2] * w)   # odd  *time positions*
    """
    i = jnp.arange(max_length, dtype=jnp.float32)[:, None]
    j = jnp.arange(dim)[None, :]
    seed = i / jnp.power(10000.0, (2.0 * (j // 2)).astype(jnp.float32) / dim)
    even_row = (jnp.arange(max_length) % 2 == 0)[:, None]
    return jnp.where(even_row, jnp.sin(seed * w), jnp.cos(seed * w)).astype(jnp.float32)


def make_attention_block(params, *, batch, query_len, sentence_len,
                         w_query=1.0, w_key=1.0,
                         max_timestep=64, max_sentence_length=64, timestep=0):
    """One-time parameter preprocessing + a jitted hot-path apply(q, k, v)."""
    B, Tq, Tk = batch, query_len, sentence_len
    Dq, H = params["wq"].shape
    Dk = params["wk"].shape[0]
    Dv = params["wv"].shape[0]
    O = params["wo"].shape[1]
    Dmax = max(Dq, Dk + Dv)                    # shared row space of the block-diag weight
    LANE = _round_up(max(3 * H, O + Tk), 128)  # lane width of slab and packed output
    f32 = jnp.float32

    # ---- one-time preprocessing (hoisted out of the hot path) ----
    pe_q = make_positional_encoding(max_timestep, Dq, w_query)[timestep:timestep + Tq]
    pe_k = make_positional_encoding(max_sentence_length, Dk, w_key)[0:Tk]

    # Row layout of the single parameter slab (sublane-aligned offsets).
    r_bp = _round_up(Dmax, 8)            # fused projection bias row
    r_wo = _round_up(r_bp + 1, 8)        # output projection weight
    r_bo = _round_up(r_wo + H, 8)        # output projection bias row
    rows = _round_up(r_bo + 1, 8)

    slab = jnp.zeros((rows, LANE), f32)
    # block-diagonal projection weight: q-cols -> [0:H], k-cols -> [H:2H], v -> [2H:3H]
    slab = slab.at[0:Dq, 0:H].set(params["wq"].astype(f32))
    slab = slab.at[0:Dk, H:2 * H].set(params["wk"].astype(f32))
    slab = slab.at[Dk:Dk + Dv, 2 * H:3 * H].set(params["wv"].astype(f32))
    # fused projection bias row [bq | bk | bv]
    slab = slab.at[r_bp, 0:H].set(params["bq"].astype(f32).reshape(-1))
    slab = slab.at[r_bp, H:2 * H].set(params["bk"].astype(f32).reshape(-1))
    slab = slab.at[r_bp, 2 * H:3 * H].set(params["bv"].astype(f32).reshape(-1))
    # output projection weight with 1/sqrt(sentence_length) folded in, plus bias
    slab = slab.at[r_wo:r_wo + H, 0:O].set(
        params["wo"].astype(f32) * f32(1.0 / math.sqrt(Tk)))
    slab = slab.at[r_bo, 0:O].set(params["bo"].astype(f32).reshape(-1))

    kernel = functools.partial(attention_block_kernel, B=B, Tq=Tq, Tk=Tk, H=H,
                               O=O, Dmax=Dmax, r_bp=r_bp, r_wo=r_wo, r_bo=r_bo)

    n_rows = B * Tq + B * Tk
    cost = pl.CostEstimate(
        flops=2 * n_rows * Dmax * LANE                      # fused projection
        + B * (2 * Tq * Tk * H                              # scores
               + 2 * Tq * Tk * H                            # attn @ V
               + 2 * Tq * H * LANE),                        # output projection
        transcendentals=B * Tq * Tk,                        # exp
        bytes_accessed=4 * (n_rows * Dmax + rows * LANE + B * Tq * LANE))

    vmem = pl.BlockSpec(memory_space=pltpu.MemorySpace.VMEM)
    pallas_fn = pl.pallas_call(
        kernel,
        out_shape=jax.ShapeDtypeStruct((B, Tq, LANE), f32),
        in_specs=[vmem, vmem],
        out_specs=vmem,
        cost_estimate=cost,
    )

    @jax.jit
    def apply(query, keys, values):
        # PE folded into the inputs; queries and keys|values stacked on the
        # row axis to feed the single block-diagonal projection matmul.
        qf = (query.astype(f32) + pe_q[None]).reshape(B * Tq, Dq)
        kvf = jnp.concatenate([keys.astype(f32) + pe_k[None],
                               values.astype(f32)],
                              axis=-1).reshape(B * Tk, Dk + Dv)
        x = jnp.concatenate(
            [jnp.pad(qf, ((0, 0), (0, Dmax - Dq))),
             jnp.pad(kvf, ((0, 0), (0, Dmax - (Dk + Dv))))], axis=0)  # (B*(Tq+Tk), Dmax)
        packed = pallas_fn(x, slab)
        out = packed[:, :, :O]
        attn = packed[:, :, O:O + Tk]
        return out, attn

    return apply


# plain-JAX reference for correctness checking
def attention_block_ref(query, keys, values, params, *, w_query=1.0, w_key=1.0,
                        max_timestep=64, max_sentence_length=64, timestep=0):
    B, Tq, Dq = query.shape
    _, Tk, Dk = keys.shape
    pe_q = make_positional_encoding(max_timestep, Dq, w_query)[timestep:timestep + Tq]
    pe_k = make_positional_encoding(max_sentence_length, Dk, w_key)[0:Tk]
    q = query + pe_q
    k = keys + pe_k
    Q = q @ params["wq"] + params["bq"]
    K = k @ params["wk"] + params["bk"]
    V = values @ params["wv"] + params["bv"]
    s = jnp.einsum("btd,bsd->bts", Q, K)
    attn = jax.nn.softmax(s, axis=-1)
    ctx = jnp.einsum("bts,bsd->btd", attn, V) / math.sqrt(Tk)
    out = ctx @ params["wo"] + params["bo"]
    return out, attn


if __name__ == "__main__":
    # Small shapes: B=2, Tq=8 (query timesteps), Tk=16 (sentence length),
    # query_size=16, keys_size=24, values_size=32, hidden_size=32, out_size=16.
    B, Tq, Tk = 2, 8, 16
    Dq, Dk, Dv, H, O = 16, 24, 32, 32, 16

    key = jax.random.PRNGKey(0)
    ks = jax.random.split(key, 11)
    query = jax.random.normal(ks[0], (B, Tq, Dq), jnp.float32)
    keys_ = jax.random.normal(ks[1], (B, Tk, Dk), jnp.float32)
    values = jax.random.normal(ks[2], (B, Tk, Dv), jnp.float32)

    params = {
        "wq": 0.1 * jax.random.normal(ks[3], (Dq, H), jnp.float32),
        "bq": 0.1 * jax.random.normal(ks[4], (1, H), jnp.float32),
        "wk": 0.1 * jax.random.normal(ks[5], (Dk, H), jnp.float32),
        "bk": 0.1 * jax.random.normal(ks[6], (1, H), jnp.float32),
        "wv": 0.1 * jax.random.normal(ks[7], (Dv, H), jnp.float32),
        "bv": 0.1 * jax.random.normal(ks[8], (1, H), jnp.float32),
        "wo": 0.1 * jax.random.normal(ks[9], (H, O), jnp.float32),
        "bo": 0.1 * jax.random.normal(ks[10], (1, O), jnp.float32),
    }

    attn_block = make_attention_block(params, batch=B, query_len=Tq, sentence_len=Tk)

    out, attn = attn_block(query, keys_, values)
    out = jax.block_until_ready(out)
    attn = jax.block_until_ready(attn)

    out_ref, attn_ref = attention_block_ref(query, keys_, values, params)
    assert np.allclose(np.asarray(out), np.asarray(out_ref), rtol=1e-4, atol=1e-4)
    assert np.allclose(np.asarray(attn), np.asarray(attn_ref), rtol=1e-4, atol=1e-4)

    print("KERNEL_OK")
</pallas_src>

<mosaic_0001>
module attributes {stable_mosaic.version = 11 : i64} {
  func.func @attention_block_kernel(%arg0: memref<48x56xf32, #tpu.memory_space<vmem>>, %arg1: memref<104x128xf32, #tpu.memory_space<vmem>>, %arg2: memref<2x8x128xf32, #tpu.memory_space<vmem>>) attributes {dimension_semantics = [], scalar_prefetch = 0 : i64, scratch_operands = 0 : i64, tpu.core_type = #tpu.core_type<tc>} {
    %c0 = arith.constant 0 : index
    %c0_0 = arith.constant 0 : index
    %0 = vector.load %arg1[%c0, %c0_0] : memref<104x128xf32, #tpu.memory_space<vmem>>, vector<56x128xf32>
    %c56 = arith.constant 56 : index
    %c0_1 = arith.constant 0 : index
    %1 = vector.load %arg1[%c56, %c0_1] : memref<104x128xf32, #tpu.memory_space<vmem>>, vector<1x128xf32>
    %c0_2 = arith.constant 0 : index
    %c0_3 = arith.constant 0 : index
    %2 = vector.load %arg0[%c0_2, %c0_3] : memref<48x56xf32, #tpu.memory_space<vmem>>, vector<48x56xf32>
    %cst = arith.constant dense<0.000000e+00> : vector<48x128xf32>
    %3 = tpu.matmul %2, %0, %cst {dimension_numbers = #tpu.dot_dimension_numbers<[1], [0], [0], [1], [0, 0, 1, 1], [], []>} : vector<48x56xf32>, vector<56x128xf32>, vector<48x128xf32> -> vector<48x128xf32>
    %4 = vector.broadcast %1 : vector<1x128xf32> to vector<48x128xf32>
    %5 = arith.addf %3, %4 : vector<48x128xf32>
    %c64 = arith.constant 64 : index
    %c0_4 = arith.constant 0 : index
    %6 = vector.load %arg1[%c64, %c0_4] : memref<104x128xf32, #tpu.memory_space<vmem>>, vector<32x128xf32>
    %c96 = arith.constant 96 : index
    %c0_5 = arith.constant 0 : index
    %7 = vector.load %arg1[%c96, %c0_5] : memref<104x128xf32, #tpu.memory_space<vmem>>, vector<1x128xf32>
    %8 = vector.shape_cast %7 : vector<1x128xf32> to vector<1x128xf32>
    %9 = vector.broadcast %8 : vector<1x128xf32> to vector<8x128xf32>
    %10 = vector.extract_strided_slice %5 {offsets = [0, 0], sizes = [8, 32], strides = [1, 1]} : vector<48x128xf32> to vector<8x32xf32>
    %11 = vector.extract_strided_slice %5 {offsets = [16, 32], sizes = [16, 32], strides = [1, 1]} : vector<48x128xf32> to vector<16x32xf32>
    %12 = vector.extract_strided_slice %5 {offsets = [16, 64], sizes = [16, 32], strides = [1, 1]} : vector<48x128xf32> to vector<16x32xf32>
    %cst_6 = arith.constant dense<0.000000e+00> : vector<8x16xf32>
    %13 = tpu.matmul %10, %11, %cst_6 {dimension_numbers = #tpu.dot_dimension_numbers<[1], [1], [0], [0], [0, 0, 1, 0], [], []>} : vector<8x32xf32>, vector<16x32xf32>, vector<8x16xf32> -> vector<8x16xf32>
    %cst_7 = arith.constant dense<0xFF800000> : vector<8xf32>
    %14 = vector.multi_reduction <maximumf>, %13, %cst_7 [1] : vector<8x16xf32> to vector<8xf32>
    %15 = vector.shape_cast %14 : vector<8xf32> to vector<8x1xf32>
    %16 = vector.broadcast %15 : vector<8x1xf32> to vector<8x16xf32>
    %17 = arith.subf %13, %16 : vector<8x16xf32>
    %18 = math.exp %17 : vector<8x16xf32>
    %cst_8 = arith.constant dense<0.000000e+00> : vector<8xf32>
    %19 = vector.multi_reduction <add>, %18, %cst_8 [1] : vector<8x16xf32> to vector<8xf32>
    %20 = vector.shape_cast %19 : vector<8xf32> to vector<8x1xf32>
    %21 = tpu.reciprocal %20 : vector<8x1xf32> -> vector<8x1xf32>
    %22 = vector.broadcast %21 : vector<8x1xf32> to vector<8x16xf32>
    %23 = arith.mulf %18, %22 : vector<8x16xf32>
    %cst_9 = arith.constant dense<0.000000e+00> : vector<8x32xf32>
    %24 = tpu.matmul %23, %12, %cst_9 {dimension_numbers = #tpu.dot_dimension_numbers<[1], [0], [0], [1], [0, 0, 1, 1], [], []>} : vector<8x16xf32>, vector<16x32xf32>, vector<8x32xf32> -> vector<8x32xf32>
    %cst_10 = arith.constant dense<0.000000e+00> : vector<8x128xf32>
    %25 = tpu.matmul %24, %6, %cst_10 {dimension_numbers = #tpu.dot_dimension_numbers<[1], [0], [0], [1], [0, 0, 1, 1], [], []>} : vector<8x32xf32>, vector<32x128xf32>, vector<8x128xf32> -> vector<8x128xf32>
    %26 = arith.addf %25, %9 : vector<8x128xf32>
    %c0_11 = arith.constant 0 : index
    %c0_12 = arith.constant 0 : index
    %c0_13 = arith.constant 0 : index
    %27 = vector.load %arg2[%c0_11, %c0_12, %c0_13] : memref<2x8x128xf32, #tpu.memory_space<vmem>>, vector<1x8x128xf32>
    %28 = vector.shape_cast %27 : vector<1x8x128xf32> to vector<8x128xf32>
    %29 = vector.shape_cast %26 : vector<8x128xf32> to vector<1x8x128xf32>
    tpu.vector_store %arg2[%c0_11, %c0_12, %c0_13], %29 {strides = array<i32>} : memref<2x8x128xf32, #tpu.memory_space<vmem>>, vector<1x8x128xf32>,
    %c0_14 = arith.constant 0 : index
    %c0_15 = arith.constant 0 : index
    %c16 = arith.constant 16 : index
    %30 = vector.load %arg2[%c0_14, %c0_15, %c16] : memref<2x8x128xf32, #tpu.memory_space<vmem>>, vector<1x8x16xf32>
    %31 = vector.shape_cast %30 : vector<1x8x16xf32> to vector<8x16xf32>
    %32 = vector.shape_cast %23 : vector<8x16xf32> to vector<1x8x16xf32>
    tpu.vector_store %arg2[%c0_14, %c0_15, %c16], %32 {strides = array<i32>} : memref<2x8x128xf32, #tpu.memory_space<vmem>>, vector<1x8x16xf32>,
    %33 = vector.extract_strided_slice %5 {offsets = [8, 0], sizes = [8, 32], strides = [1, 1]} : vector<48x128xf32> to vector<8x32xf32>
    %34 = vector.extract_strided_slice %5 {offsets = [32, 32], sizes = [16, 32], strides = [1, 1]} : vector<48x128xf32> to vector<16x32xf32>
    %35 = vector.extract_strided_slice %5 {offsets = [32, 64], sizes = [16, 32], strides = [1, 1]} : vector<48x128xf32> to vector<16x32xf32>
    %cst_16 = arith.constant dense<0.000000e+00> : vector<8x16xf32>
    %36 = tpu.matmul %33, %34, %cst_16 {dimension_numbers = #tpu.dot_dimension_numbers<[1], [1], [0], [0], [0, 0, 1, 0], [], []>} : vector<8x32xf32>, vector<16x32xf32>, vector<8x16xf32> -> vector<8x16xf32>
    %cst_17 = arith.constant dense<0xFF800000> : vector<8xf32>
    %37 = vector.multi_reduction <maximumf>, %36, %cst_17 [1] : vector<8x16xf32> to vector<8xf32>
    %38 = vector.shape_cast %37 : vector<8xf32> to vector<8x1xf32>
    %39 = vector.broadcast %38 : vector<8x1xf32> to vector<8x16xf32>
    %40 = arith.subf %36, %39 : vector<8x16xf32>
    %41 = math.exp %40 : vector<8x16xf32>
    %cst_18 = arith.constant dense<0.000000e+00> : vector<8xf32>
    %42 = vector.multi_reduction <add>, %41, %cst_18 [1] : vector<8x16xf32> to vector<8xf32>
    %43 = vector.shape_cast %42 : vector<8xf32> to vector<8x1xf32>
    %44 = tpu.reciprocal %43 : vector<8x1xf32> -> vector<8x1xf32>
    %45 = vector.broadcast %44 : vector<8x1xf32> to vector<8x16xf32>
    %46 = arith.mulf %41, %45 : vector<8x16xf32>
    %cst_19 = arith.constant dense<0.000000e+00> : vector<8x32xf32>
    %47 = tpu.matmul %46, %35, %cst_19 {dimension_numbers = #tpu.dot_dimension_numbers<[1], [0], [0], [1], [0, 0, 1, 1], [], []>} : vector<8x16xf32>, vector<16x32xf32>, vector<8x32xf32> -> vector<8x32xf32>
    %cst_20 = arith.constant dense<0.000000e+00> : vector<8x128xf32>
    %48 = tpu.matmul %47, %6, %cst_20 {dimension_numbers = #tpu.dot_dimension_numbers<[1], [0], [0], [1], [0, 0, 1, 1], [], []>} : vector<8x32xf32>, vector<32x128xf32>, vector<8x128xf32> -> vector<8x128xf32>
    %49 = arith.addf %48, %9 : vector<8x128xf32>
    %c1 = arith.constant 1 : index
    %c0_21 = arith.constant 0 : index
    %c0_22 = arith.constant 0 : index
    %50 = vector.load %arg2[%c1, %c0_21, %c0_22] : memref<2x8x128xf32, #tpu.memory_space<vmem>>, vector<1x8x128xf32>
    %51 = vector.shape_cast %50 : vector<1x8x128xf32> to vector<8x128xf32>
    %52 = vector.shape_cast %49 : vector<8x128xf32> to vector<1x8x128xf32>
    tpu.vector_store %arg2[%c1, %c0_21, %c0_22], %52 {strides = array<i32>} : memref<2x8x128xf32, #tpu.memory_space<vmem>>, vector<1x8x128xf32>,
    %c1_23 = arith.constant 1 : index
    %c0_24 = arith.constant 0 : index
    %c16_25 = arith.constant 16 : index
    %53 = vector.load %arg2[%c1_23, %c0_24, %c16_25] : memref<2x8x128xf32, #tpu.memory_space<vmem>>, vector<1x8x16xf32>
    %54 = vector.shape_cast %53 : vector<1x8x16xf32> to vector<8x16xf32>
    %55 = vector.shape_cast %46 : vector<8x16xf32> to vector<1x8x16xf32>
    tpu.vector_store %arg2[%c1_23, %c0_24, %c16_25], %55 {strides = array<i32>} : memref<2x8x128xf32, #tpu.memory_space<vmem>>, vector<1x8x16xf32>,
    return
  }
}

</mosaic_0001>

<llo_original>
// kernel: apply.1
$region0: #{apply.1}
  #allocation0 [shape = 'u32[]', space=smem, size = 0x4, offset = 0x4, fixed_abs, tag = 'smem constant byte address 0x4 - core index']
  #allocation1 [shape = 'u32[144,128]{1,0:T(1,128)}', space=vmem, size = 0x12000, scoped, tag = 'internal scratch']
  %s0 = inlined_call_operand.vmem [shape: f32[48,56], index: 0, kind: input, shape index: {}]
  %s1 = inlined_call_operand.vmem [shape: f32[104,128], index: 1, kind: input, shape index: {}]
  %s2 = inlined_call_operand.vmem [shape: f32[2,8,128], index: 2, kind: output, shape index: {}]
  %s3 = sld [smem:[#allocation0]]
  $region18: #{apply.1} parent=0
    _
  %s5 = ssub.s32 1, %s3
  %s6 = scalar_select 0, %s5, %s3
  // Predicated region
  $region2: #{apply.1} parent=0 // pred_check
    _
  $region3: #{apply.1} parent=0 // pred_check_branch
    %8 = sbr.rel (0) target = $region5
  $region4: #{apply.1} parent=0 // pred_region
    _
  $region5: #{apply.1} parent=0 // pred_fallthru
    _
  // Predicated region
  $region6: #{apply.1} parent=0 // pred_check
    _
  $region7: #{apply.1} parent=0 // pred_check_branch
    %10 = sbr.rel (0) target = $region9
  $region8: #{apply.1} parent=0 // pred_region
    _
  $region9: #{apply.1} parent=0 // pred_fallthru
    _
  %v11 = vld [vmem:[%s1] sm:$0xff]
  %v12 = vld [vmem:[%s1 + $0x8] sm:$0xff]
  %v13 = vld [vmem:[%s1 + $0x10] sm:$0xff]
  %v14 = vld [vmem:[%s1 + $0x18] sm:$0xff]
  %v15 = vld [vmem:[%s1 + $0x20] sm:$0xff]
  %v16 = vld [vmem:[%s1 + $0x28] sm:$0xff]
  %v17 = vld [vmem:[%s1 + $0x30] sm:$0xff]
  %v18 = vld [vmem:[%s1 + $0x38] sm:$0x1]
  %v19 = vld [vmem:[%s0] sm:$0xff]
  %v20 = vld [vmem:[%s0 + $0x8] sm:$0xff]
  %v21 = vld [vmem:[%s0 + $0x10] sm:$0xff]
  %v22 = vld [vmem:[%s0 + $0x18] sm:$0xff]
  %v23 = vld [vmem:[%s0 + $0x20] sm:$0xff]
  %v24 = vld [vmem:[%s0 + $0x28] sm:$0xff]
  %v25 = vlaneseq
  %v26 = vshrl.u32 %v25, 7
  %v27 = vsub.s32 0, %v26
  %v28 = vrot.slane %v18, %v27
  %vm29 = vcmask 457728
  %v31 = vsel %vm29, %v19, 0
  %v34 = vsel %vm29, %v20, 0
  %v37 = vsel %vm29, %v21, 0
  %v40 = vsel %vm29, %v22, 0
  %v43 = vsel %vm29, %v23, 0
  %v46 = vsel %vm29, %v24, 0
  %48 = vmatprep.subr.mxu0 0.0
  %49 = vmatpush1.msra.mxu0 %v11
  %50 = vmatprep.subr.mxu0 0.0
  %51 = vmatpush1.msra.mxu0 %v12
  %52 = vmatprep.subr.mxu0 0.0
  %53 = vmatpush1.msra.mxu0 %v13
  %54 = vmatprep.subr.mxu0 0.0
  %55 = vmatpush1.msra.mxu0 %v14
  %56 = vmatprep.subr.mxu0 0.0
  %57 = vmatpush1.msra.mxu0 %v15
  %58 = vmatprep.subr.mxu0 0.0
  %59 = vmatpush1.msra.mxu0 %v16
  %60 = vmatprep.subr.mxu0 0.0
  %61 = vmatpush1.msra.mxu0 %v17
  %62 = vmatprep.subr.mxu0 0.0
  %63 = vmatpush1.msra.mxu0 0.0
  %64 = vmatprep.subr.mxu0 0.0
  %65 = vmatpush1.msra.mxu0 0.0
  %66 = vmatprep.subr.mxu0 0.0
  %67 = vmatpush1.msra.mxu0 0.0
  %68 = vmatprep.subr.mxu0 0.0
  %69 = vmatpush1.msra.mxu0 0.0
  %70 = vmatprep.subr.mxu0 0.0
  %71 = vmatpush1.msra.mxu0 0.0
  %72 = vmatprep.subr.mxu0 0.0
  %73 = vmatpush1.msra.mxu0 0.0
  %74 = vmatprep.subr.mxu0 0.0
  %75 = vmatpush1.msra.mxu0 0.0
  %76 = vmatprep.subr.mxu0 0.0
  %77 = vmatpush1.msra.mxu0 0.0
  %78 = vmatprep.subr.mxu0 0.0
  %79 = vmatpush1.msra.mxu0 0.0
  %80 = vmatprep.subr.mxu0 0.0
  %81 = vmatpush1.msra.mxu0 0.0
  %82 = vmatprep.subr.mxu0 0.0
  %83 = vmatpush1.msra.mxu0 0.0
  %84 = vmatprep.subr.mxu0 0.0
  %85 = vmatpush1.msra.mxu0 0.0
  %86 = vmatprep.subr.mxu0 0.0
  %87 = vmatpush1.msra.mxu0 0.0
  %88 = vmatprep.subr.mxu0 0.0
  %89 = vmatpush1.msra.mxu0 0.0
  %90 = vmatprep.subr.mxu0 0.0
  %91 = vmatpush1.msra.mxu0 0.0
  %92 = vmatprep.subr.mxu0 0.0
  %93 = vmatpush1.msra.mxu0 0.0
  %94 = vmatprep.subr.mxu0 0.0
  %95 = vmatpush1.msra.mxu0 0.0
  %96 = vmatprep.subr.mxu0 0.0
  %97 = vmatpush1.msra.mxu0 0.0
  %98 = vmatprep.subr.mxu0 0.0
  %99 = vmatpush1.msra.mxu0 0.0
  %100 = vmatprep.subr.mxu0 0.0
  %101 = vmatpush1.msra.mxu0 0.0
  %102 = vmatprep.subr.mxu0 0.0
  %103 = vmatpush1.msra.mxu0 0.0
  %104 = vmatprep.subr.mxu0 0.0
  %105 = vmatpush1.msra.mxu0 0.0
  %106 = vmatprep.subr.mxu0 0.0
  %107 = vmatpush1.msra.mxu0 0.0
  %108 = vmatprep.subr.mxu0 0.0
  %109 = vmatpush1.msra.mxu0 0.0
  %110 = vmatprep.subr.mxu0 0.0
  %111 = vmatpush1.msra.mxu0 0.0
  %112 = vmatprep.mubr.f32.mxu0 0.0
  %113 = vmatmul.mubr.f32.gmra.mrb[0].mxu0 %v31
  %v114 = vpop.f32.mrb[0].mxu0
  %v115 = vadd.f32 %v28, %v114
  %v116 = vpop.f32.mrb[0].mxu0
  %117 = vmatprep.mubr.f32.mxu0 0.0
  %118 = vmatmul.mubr.f32.gmra.mrb[0].mxu0 %v34
  %v119 = vpop.f32.mrb[0].mxu0
  %v120 = vadd.f32 %v28, %v119
  %v121 = vpop.f32.mrb[0].mxu0
  %122 = vmatprep.mubr.f32.mxu0 0.0
  %123 = vmatmul.mubr.f32.gmra.mrb[0].mxu0 %v37
  %v124 = vpop.f32.mrb[0].mxu0
  %v125 = vadd.f32 %v28, %v124
  %v126 = vpop.f32.mrb[0].mxu0
  %127 = vmatprep.mubr.f32.mxu0 0.0
  %128 = vmatmul.mubr.f32.gmra.mrb[0].mxu0 %v40
  %v129 = vpop.f32.mrb[0].mxu0
  %v130 = vadd.f32 %v28, %v129
  %v131 = vpop.f32.mrb[0].mxu0
  %132 = vmatprep.mubr.f32.mxu0 0.0
  %133 = vmatmul.mubr.f32.gmra.mrb[0].mxu0 %v43
  %v134 = vpop.f32.mrb[0].mxu0
  %v135 = vadd.f32 %v28, %v134
  %v136 = vpop.f32.mrb[0].mxu0
  %137 = vmatprep.mubr.f32.mxu0 0.0
  %138 = vmatmul.mubr.f32.gmra.mrb[0].mxu0 %v46
  %v139 = vpop.f32.mrb[0].mxu0
  %v140 = vadd.f32 %v28, %v139
  %v141 = vpop.f32.mrb[0].mxu0
  %142 = vdwg.mxu0
  %v143 = vld [vmem:[%s1 + $0x40] sm:$0xff]
  %v144 = vld [vmem:[%s1 + $0x48] sm:$0xff]
  %v145 = vld [vmem:[%s1 + $0x50] sm:$0xff]
  %v146 = vld [vmem:[%s1 + $0x58] sm:$0xff]
  %v147 = vld [vmem:[%s1 + $0x60] sm:$0x1]
  %v148 = vlaneseq
  %v149 = vshrl.u32 %v148, 7
  %v150 = vsub.s32 0, %v149
  %v151 = vrot.slane %v147, %v150
  %154 = vrot.lane.b32.xlu0 %v125, 96
  %v155 = vpop.permute.xlu0 %154
  %156 = vrot.lane.b32.xlu0 %v130, 96
  %v157 = vpop.permute.xlu0 %156
  %vm158 = vcmask 261120
  %v160 = vsel %vm158, %v115, 0
  %v162 = vsel %vm158, %v155, 0
  %v164 = vsel %vm158, %v157, 0
  %166 = vmatprep.subr.mxu0 0.0
  %167 = vmatpush1.xpose.msra.mxu0 %v162
  %168 = vmatprep.subr.mxu0 0.0
  %169 = vmatpush1.xpose.msra.mxu0 %v164
  %170 = vmatprep.subr.mxu0 0.0
  %171 = vmatpush1.xpose.msra.mxu0 0.0
  %172 = vmatprep.subr.mxu0 0.0
  %173 = vmatpush1.xpose.msra.mxu0 0.0
  %174 = vmatprep.subr.mxu0 0.0
  %175 = vmatpush1.xpose.msra.mxu0 0.0
  %176 = vmatprep.subr.mxu0 0.0
  %177 = vmatpush1.xpose.msra.mxu0 0.0
  %178 = vmatprep.subr.mxu0 0.0
  %179 = vmatpush1.xpose.msra.mxu0 0.0
  %180 = vmatprep.subr.mxu0 0.0
  %181 = vmatpush1.xpose.msra.mxu0 0.0
  %182 = vmatprep.subr.mxu0 0.0
  %183 = vmatpush1.xpose.msra.mxu0 0.0
  %184 = vmatprep.subr.mxu0 0.0
  %185 = vmatpush1.xpose.msra.mxu0 0.0
  %186 = vmatprep.subr.mxu0 0.0
  %187 = vmatpush1.xpose.msra.mxu0 0.0
  %188 = vmatprep.subr.mxu0 0.0
  %189 = vmatpush1.xpose.msra.mxu0 0.0
  %190 = vmatprep.subr.mxu0 0.0
  %191 = vmatpush1.xpose.msra.mxu0 0.0
  %192 = vmatprep.subr.mxu0 0.0
  %193 = vmatpush1.xpose.msra.mxu0 0.0
  %194 = vmatprep.subr.mxu0 0.0
  %195 = vmatpush1.xpose.msra.mxu0 0.0
  %196 = vmatprep.subr.mxu0 0.0
  %197 = vmatpush1.xpose.msra.mxu0 0.0
  %198 = vmatprep.subr.mxu0 0.0
  %199 = vmatpush1.xpose.msra.mxu0 0.0
  %200 = vmatprep.subr.mxu0 0.0
  %201 = vmatpush1.xpose.msra.mxu0 0.0
  %202 = vmatprep.subr.mxu0 0.0
  %203 = vmatpush1.xpose.msra.mxu0 0.0
  %204 = vmatprep.subr.mxu0 0.0
  %205 = vmatpush1.xpose.msra.mxu0 0.0
  %206 = vmatprep.subr.mxu0 0.0
  %207 = vmatpush1.xpose.msra.mxu0 0.0
  %208 = vmatprep.subr.mxu0 0.0
  %209 = vmatpush1.xpose.msra.mxu0 0.0
  %210 = vmatprep.subr.mxu0 0.0
  %211 = vmatpush1.xpose.msra.mxu0 0.0
  %212 = vmatprep.subr.mxu0 0.0
  %213 = vmatpush1.xpose.msra.mxu0 0.0
  %214 = vmatprep.subr.mxu0 0.0
  %215 = vmatpush1.xpose.msra.mxu0 0.0
  %216 = vmatprep.subr.mxu0 0.0
  %217 = vmatpush1.xpose.msra.mxu0 0.0
  %218 = vmatprep.subr.mxu0 0.0
  %219 = vmatpush1.xpose.msra.mxu0 0.0
  %220 = vmatprep.subr.mxu0 0.0
  %221 = vmatpush1.xpose.msra.mxu0 0.0
  %222 = vmatprep.subr.mxu0 0.0
  %223 = vmatpush1.xpose.msra.mxu0 0.0
  %224 = vmatprep.subr.mxu0 0.0
  %225 = vmatpush1.xpose.msra.mxu0 0.0
  %226 = vmatprep.subr.mxu0 0.0
  %227 = vmatpush1.xpose.msra.mxu0 0.0
  %228 = vmatprep.subr.mxu0 0.0
  %229 = vmatpush1.xpose.msra.mxu0 0.0
  %230 = vmatprep.mubr.f32.mxu0 0.0
  %231 = vmatmul.mubr.f32.gmra.mrb[0].mxu0 %v160
  %v232 = vpop.f32.mrb[0].mxu0
  %v233 = vadd.f32 0.0, %v232
  %v234 = vpop.f32.mrb[0].mxu0
  %235 = vdwg.mxu0
  %vm236 = vcmask 130048
  %v237 = vsel %vm236, %v233, -inf
  %238 = vmax.xlane.f32.xlu0 %v237
  %v239 = vpop.xlane.xlu0 %238
  %v240 = vsub.f32 %v233, %v239
  %v241 = vmul.f32 %v240, 1.442695
  %v242 = vpow.pop %v241
  %v243 = vsel %vm236, %v242, 0.0
  %244 = vadd.xlane.f32.xlu0 %v243
  %v245 = vpop.xlane.xlu0 %244
  %v246 = vrcp.pop %v245
  %v247 = vmul.f32 %v242, %v246
  %248 = vrot.lane.b32.xlu0 %v125, 64
  %v249 = vpop.permute.xlu0 %248
  %250 = vrot.lane.b32.xlu0 %v130, 64
  %v251 = vpop.permute.xlu0 %250
  %v255 = vsel %vm236, %v247, 0
  %257 = vmatprep.subr.mxu0 0.0
  %258 = vmatpush1.msra.mxu0 %v249
  %259 = vmatprep.subr.mxu0 0.0
  %260 = vmatpush1.msra.mxu0 %v251
  %261 = vmatprep.subr.mxu0 0.0
  %262 = vmatpush1.msra.mxu0 0.0
  %263 = vmatprep.subr.mxu0 0.0
  %264 = vmatpush1.msra.mxu0 0.0
  %265 = vmatprep.subr.mxu0 0.0
  %266 = vmatpush1.msra.mxu0 0.0
  %267 = vmatprep.subr.mxu0 0.0
  %268 = vmatpush1.msra.mxu0 0.0
  %269 = vmatprep.subr.mxu0 0.0
  %270 = vmatpush1.msra.mxu0 0.0
  %271 = vmatprep.subr.mxu0 0.0
  %272 = vmatpush1.msra.mxu0 0.0
  %273 = vmatprep.subr.mxu0 0.0
  %274 = vmatpush1.msra.mxu0 0.0
  %275 = vmatprep.subr.mxu0 0.0
  %276 = vmatpush1.msra.mxu0 0.0
  %277 = vmatprep.subr.mxu0 0.0
  %278 = vmatpush1.msra.mxu0 0.0
  %279 = vmatprep.subr.mxu0 0.0
  %280 = vmatpush1.msra.mxu0 0.0
  %281 = vmatprep.subr.mxu0 0.0
  %282 = vmatpush1.msra.mxu0 0.0
  %283 = vmatprep.subr.mxu0 0.0
  %284 = vmatpush1.msra.mxu0 0.0
  %285 = vmatprep.subr.mxu0 0.0
  %286 = vmatpush1.msra.mxu0 0.0
  %287 = vmatprep.subr.mxu0 0.0
  %288 = vmatpush1.msra.mxu0 0.0
  %289 = vmatprep.subr.mxu0 0.0
  %290 = vmatpush1.msra.mxu0 0.0
  %291 = vmatprep.subr.mxu0 0.0
  %292 = vmatpush1.msra.mxu0 0.0
  %293 = vmatprep.subr.mxu0 0.0
  %294 = vmatpush1.msra.mxu0 0.0
  %295 = vmatprep.subr.mxu0 0.0
  %296 = vmatpush1.msra.mxu0 0.0
  %297 = vmatprep.subr.mxu0 0.0
  %298 = vmatpush1.msra.mxu0 0.0
  %299 = vmatprep.subr.mxu0 0.0
  %300 = vmatpush1.msra.mxu0 0.0
  %301 = vmatprep.subr.mxu0 0.0
  %302 = vmatpush1.msra.mxu0 0.0
  %303 = vmatprep.subr.mxu0 0.0
  %304 = vmatpush1.msra.mxu0 0.0
  %305 = vmatprep.subr.mxu0 0.0
  %306 = vmatpush1.msra.mxu0 0.0
  %307 = vmatprep.subr.mxu0 0.0
  %308 = vmatpush1.msra.mxu0 0.0
  %309 = vmatprep.subr.mxu0 0.0
  %310 = vmatpush1.msra.mxu0 0.0
  %311 = vmatprep.subr.mxu0 0.0
  %312 = vmatpush1.msra.mxu0 0.0
  %313 = vmatprep.subr.mxu0 0.0
  %314 = vmatpush1.msra.mxu0 0.0
  %315 = vmatprep.subr.mxu0 0.0
  %316 = vmatpush1.msra.mxu0 0.0
  %317 = vmatprep.subr.mxu0 0.0
  %318 = vmatpush1.msra.mxu0 0.0
  %319 = vmatprep.subr.mxu0 0.0
  %320 = vmatpush1.msra.mxu0 0.0
  %321 = vmatprep.mubr.f32.mxu0 0.0
  %322 = vmatmul.mubr.f32.gmra.mrb[0].mxu0 %v255
  %v323 = vpop.f32.mrb[0].mxu0
  %v324 = vadd.f32 0.0, %v323
  %v325 = vpop.f32.mrb[0].mxu0
  %326 = vdwg.mxu0
  %v328 = vsel %vm158, %v324, 0
  %330 = vmatprep.subr.mxu0 0.0
  %331 = vmatpush1.msra.mxu0 %v143
  %332 = vmatprep.subr.mxu0 0.0
  %333 = vmatpush1.msra.mxu0 %v144
  %334 = vmatprep.subr.mxu0 0.0
  %335 = vmatpush1.msra.mxu0 %v145
  %336 = vmatprep.subr.mxu0 0.0
  %337 = vmatpush1.msra.mxu0 %v146
  %338 = vmatprep.subr.mxu0 0.0
  %339 = vmatpush1.msra.mxu0 0.0
  %340 = vmatprep.subr.mxu0 0.0
  %341 = vmatpush1.msra.mxu0 0.0
  %342 = vmatprep.subr.mxu0 0.0
  %343 = vmatpush1.msra.mxu0 0.0
  %344 = vmatprep.subr.mxu0 0.0
  %345 = vmatpush1.msra.mxu0 0.0
  %346 = vmatprep.subr.mxu0 0.0
  %347 = vmatpush1.msra.mxu0 0.0
  %348 = vmatprep.subr.mxu0 0.0
  %349 = vmatpush1.msra.mxu0 0.0
  %350 = vmatprep.subr.mxu0 0.0
  %351 = vmatpush1.msra.mxu0 0.0
  %352 = vmatprep.subr.mxu0 0.0
  %353 = vmatpush1.msra.mxu0 0.0
  %354 = vmatprep.subr.mxu0 0.0
  %355 = vmatpush1.msra.mxu0 0.0
  %356 = vmatprep.subr.mxu0 0.0
  %357 = vmatpush1.msra.mxu0 0.0
  %358 = vmatprep.subr.mxu0 0.0
  %359 = vmatpush1.msra.mxu0 0.0
  %360 = vmatprep.subr.mxu0 0.0
  %361 = vmatpush1.msra.mxu0 0.0
  %362 = vmatprep.subr.mxu0 0.0
  %363 = vmatpush1.msra.mxu0 0.0
  %364 = vmatprep.subr.mxu0 0.0
  %365 = vmatpush1.msra.mxu0 0.0
  %366 = vmatprep.subr.mxu0 0.0
  %367 = vmatpush1.msra.mxu0 0.0
  %368 = vmatprep.subr.mxu0 0.0
  %369 = vmatpush1.msra.mxu0 0.0
  %370 = vmatprep.subr.mxu0 0.0
  %371 = vmatpush1.msra.mxu0 0.0
  %372 = vmatprep.subr.mxu0 0.0
  %373 = vmatpush1.msra.mxu0 0.0
  %374 = vmatprep.subr.mxu0 0.0
  %375 = vmatpush1.msra.mxu0 0.0
  %376 = vmatprep.subr.mxu0 0.0
  %377 = vmatpush1.msra.mxu0 0.0
  %378 = vmatprep.subr.mxu0 0.0
  %379 = vmatpush1.msra.mxu0 0.0
  %380 = vmatprep.subr.mxu0 0.0
  %381 = vmatpush1.msra.mxu0 0.0
  %382 = vmatprep.subr.mxu0 0.0
  %383 = vmatpush1.msra.mxu0 0.0
  %384 = vmatprep.subr.mxu0 0.0
  %385 = vmatpush1.msra.mxu0 0.0
  %386 = vmatprep.subr.mxu0 0.0
  %387 = vmatpush1.msra.mxu0 0.0
  %388 = vmatprep.subr.mxu0 0.0
  %389 = vmatpush1.msra.mxu0 0.0
  %390 = vmatprep.subr.mxu0 0.0
  %391 = vmatpush1.msra.mxu0 0.0
  %392 = vmatprep.subr.mxu0 0.0
  %393 = vmatpush1.msra.mxu0 0.0
  %394 = vmatprep.mubr.f32.mxu0 0.0
  %395 = vmatmul.mubr.f32.gmra.mrb[0].mxu0 %v328
  %v396 = vpop.f32.mrb[0].mxu0
  %v397 = vadd.f32 %v151, %v396
  %v398 = vpop.f32.mrb[0].mxu0
  %399 = vdwg.mxu0
  %400 = vst [vmem:[%s2] sm:$0xff] %v397
  %401 = vrot.lane.b32.xlu0 %v247, 16
  %v402 = vpop.permute.xlu0 %401
  %vm404 = vcmask 261248
  %405 = vst.msk [vmem:[%s2] sm:$0xff] %vm404, %v402
  %408 = vrot.lane.b32.xlu0 %v135, 96
  %v409 = vpop.permute.xlu0 %408
  %410 = vrot.lane.b32.xlu0 %v140, 96
  %v411 = vpop.permute.xlu0 %410
  %v413 = vsel %vm158, %v120, 0
  %v415 = vsel %vm158, %v409, 0
  %v417 = vsel %vm158, %v411, 0
  %419 = vmatprep.subr.mxu0 0.0
  %420 = vmatpush1.xpose.msra.mxu0 %v415
  %421 = vmatprep.subr.mxu0 0.0
  %422 = vmatpush1.xpose.msra.mxu0 %v417
  %423 = vmatprep.subr.mxu0 0.0
  %424 = vmatpush1.xpose.msra.mxu0 0.0
  %425 = vmatprep.subr.mxu0 0.0
  %426 = vmatpush1.xpose.msra.mxu0 0.0
  %427 = vmatprep.subr.mxu0 0.0
  %428 = vmatpush1.xpose.msra.mxu0 0.0
  %429 = vmatprep.subr.mxu0 0.0
  %430 = vmatpush1.xpose.msra.mxu0 0.0
  %431 = vmatprep.subr.mxu0 0.0
  %432 = vmatpush1.xpose.msra.mxu0 0.0
  %433 = vmatprep.subr.mxu0 0.0
  %434 = vmatpush1.xpose.msra.mxu0 0.0
  %435 = vmatprep.subr.mxu0 0.0
  %436 = vmatpush1.xpose.msra.mxu0 0.0
  %437 = vmatprep.subr.mxu0 0.0
  %438 = vmatpush1.xpose.msra.mxu0 0.0
  %439 = vmatprep.subr.mxu0 0.0
  %440 = vmatpush1.xpose.msra.mxu0 0.0
  %441 = vmatprep.subr.mxu0 0.0
  %442 = vmatpush1.xpose.msra.mxu0 0.0
  %443 = vmatprep.subr.mxu0 0.0
  %444 = vmatpush1.xpose.msra.mxu0 0.0
  %445 = vmatprep.subr.mxu0 0.0
  %446 = vmatpush1.xpose.msra.mxu0 0.0
  %447 = vmatprep.subr.mxu0 0.0
  %448 = vmatpush1.xpose.msra.mxu0 0.0
  %449 = vmatprep.subr.mxu0 0.0
  %450 = vmatpush1.xpose.msra.mxu0 0.0
  %451 = vmatprep.subr.mxu0 0.0
  %452 = vmatpush1.xpose.msra.mxu0 0.0
  %453 = vmatprep.subr.mxu0 0.0
  %454 = vmatpush1.xpose.msra.mxu0 0.0
  %455 = vmatprep.subr.mxu0 0.0
  %456 = vmatpush1.xpose.msra.mxu0 0.0
  %457 = vmatprep.subr.mxu0 0.0
  %458 = vmatpush1.xpose.msra.mxu0 0.0
  %459 = vmatprep.subr.mxu0 0.0
  %460 = vmatpush1.xpose.msra.mxu0 0.0
  %461 = vmatprep.subr.mxu0 0.0
  %462 = vmatpush1.xpose.msra.mxu0 0.0
  %463 = vmatprep.subr.mxu0 0.0
  %464 = vmatpush1.xpose.msra.mxu0 0.0
  %465 = vmatprep.subr.mxu0 0.0
  %466 = vmatpush1.xpose.msra.mxu0 0.0
  %467 = vmatprep.subr.mxu0 0.0
  %468 = vmatpush1.xpose.msra.mxu0 0.0
  %469 = vmatprep.subr.mxu0 0.0
  %470 = vmatpush1.xpose.msra.mxu0 0.0
  %471 = vmatprep.subr.mxu0 0.0
  %472 = vmatpush1.xpose.msra.mxu0 0.0
  %473 = vmatprep.subr.mxu0 0.0
  %474 = vmatpush1.xpose.msra.mxu0 0.0
  %475 = vmatprep.subr.mxu0 0.0
  %476 = vmatpush1.xpose.msra.mxu0 0.0
  %477 = vmatprep.subr.mxu0 0.0
  %478 = vmatpush1.xpose.msra.mxu0 0.0
  %479 = vmatprep.subr.mxu0 0.0
  %480 = vmatpush1.xpose.msra.mxu0 0.0
  %481 = vmatprep.subr.mxu0 0.0
  %482 = vmatpush1.xpose.msra.mxu0 0.0
  %483 = vmatprep.mubr.f32.mxu0 0.0
  %484 = vmatmul.mubr.f32.gmra.mrb[0].mxu0 %v413
  %v485 = vpop.f32.mrb[0].mxu0
  %v486 = vadd.f32 0.0, %v485
  %v487 = vpop.f32.mrb[0].mxu0
  %488 = vdwg.mxu0
  %v489 = vsel %vm236, %v486, -inf
  %490 = vmax.xlane.f32.xlu0 %v489
  %v491 = vpop.xlane.xlu0 %490
  %v492 = vsub.f32 %v486, %v491
  %v493 = vmul.f32 %v492, 1.442695
  %v494 = vpow.pop %v493
  %v495 = vsel %vm236, %v494, 0.0
  %496 = vadd.xlane.f32.xlu0 %v495
  %v497 = vpop.xlane.xlu0 %496
  %v498 = vrcp.pop %v497
  %v499 = vmul.f32 %v494, %v498
  %500 = vrot.lane.b32.xlu0 %v135, 64
  %v501 = vpop.permute.xlu0 %500
  %502 = vrot.lane.b32.xlu0 %v140, 64
  %v503 = vpop.permute.xlu0 %502
  %v507 = vsel %vm236, %v499, 0
  %509 = vmatprep.subr.mxu0 0.0
  %510 = vmatpush1.msra.mxu0 %v501
  %511 = vmatprep.subr.mxu0 0.0
  %512 = vmatpush1.msra.mxu0 %v503
  %513 = vmatprep.subr.mxu0 0.0
  %514 = vmatpush1.msra.mxu0 0.0
  %515 = vmatprep.subr.mxu0 0.0
  %516 = vmatpush1.msra.mxu0 0.0
  %517 = vmatprep.subr.mxu0 0.0
  %518 = vmatpush1.msra.mxu0 0.0
  %519 = vmatprep.subr.mxu0 0.0
  %520 = vmatpush1.msra.mxu0 0.0
  %521 = vmatprep.subr.mxu0 0.0
  %522 = vmatpush1.msra.mxu0 0.0
  %523 = vmatprep.subr.mxu0 0.0
  %524 = vmatpush1.msra.mxu0 0.0
  %525 = vmatprep.subr.mxu0 0.0
  %526 = vmatpush1.msra.mxu0 0.0
  %527 = vmatprep.subr.mxu0 0.0
  %528 = vmatpush1.msra.mxu0 0.0
  %529 = vmatprep.subr.mxu0 0.0
  %530 = vmatpush1.msra.mxu0 0.0
  %531 = vmatprep.subr.mxu0 0.0
  %532 = vmatpush1.msra.mxu0 0.0
  %533 = vmatprep.subr.mxu0 0.0
  %534 = vmatpush1.msra.mxu0 0.0
  %535 = vmatprep.subr.mxu0 0.0
  %536 = vmatpush1.msra.mxu0 0.0
  %537 = vmatprep.subr.mxu0 0.0
  %538 = vmatpush1.msra.mxu0 0.0
  %539 = vmatprep.subr.mxu0 0.0
  %540 = vmatpush1.msra.mxu0 0.0
  %541 = vmatprep.subr.mxu0 0.0
  %542 = vmatpush1.msra.mxu0 0.0
  %543 = vmatprep.subr.mxu0 0.0
  %544 = vmatpush1.msra.mxu0 0.0
  %545 = vmatprep.subr.mxu0 0.0
  %546 = vmatpush1.msra.mxu0 0.0
  %547 = vmatprep.subr.mxu0 0.0
  %548 = vmatpush1.msra.mxu0 0.0
  %549 = vmatprep.subr.mxu0 0.0
  %550 = vmatpush1.msra.mxu0 0.0
  %551 = vmatprep.subr.mxu0 0.0
  %552 = vmatpush1.msra.mxu0 0.0
  %553 = vmatprep.subr.mxu0 0.0
  %554 = vmatpush1.msra.mxu0 0.0
  %555 = vmatprep.subr.mxu0 0.0
  %556 = vmatpush1.msra.mxu0 0.0
  %557 = vmatprep.subr.mxu0 0.0
  %558 = vmatpush1.msra.mxu0 0.0
  %559 = vmatprep.subr.mxu0 0.0
  %560 = vmatpush1.msra.mxu0 0.0
  %561 = vmatprep.subr.mxu0 0.0
  %562 = vmatpush1.msra.mxu0 0.0
  %563 = vmatprep.subr.mxu0 0.0
  %564 = vmatpush1.msra.mxu0 0.0
  %565 = vmatprep.subr.mxu0 0.0
  %566 = vmatpush1.msra.mxu0 0.0
  %567 = vmatprep.subr.mxu0 0.0
  %568 = vmatpush1.msra.mxu0 0.0
  %569 = vmatprep.subr.mxu0 0.0
  %570 = vmatpush1.msra.mxu0 0.0
  %571 = vmatprep.subr.mxu0 0.0
  %572 = vmatpush1.msra.mxu0 0.0
  %573 = vmatprep.mubr.f32.mxu0 0.0
  %574 = vmatmul.mubr.f32.gmra.mrb[0].mxu0 %v507
  %v575 = vpop.f32.mrb[0].mxu0
  %v576 = vadd.f32 0.0, %v575
  %v577 = vpop.f32.mrb[0].mxu0
  %578 = vdwg.mxu0
  %v580 = vsel %vm158, %v576, 0
  %582 = vmatprep.subr.mxu0 0.0
  %583 = vmatpush1.msra.mxu0 %v143
  %584 = vmatprep.subr.mxu0 0.0
  %585 = vmatpush1.msra.mxu0 %v144
  %586 = vmatprep.subr.mxu0 0.0
  %587 = vmatpush1.msra.mxu0 %v145
  %588 = vmatprep.subr.mxu0 0.0
  %589 = vmatpush1.msra.mxu0 %v146
  %590 = vmatprep.subr.mxu0 0.0
  %591 = vmatpush1.msra.mxu0 0.0
  %592 = vmatprep.subr.mxu0 0.0
  %593 = vmatpush1.msra.mxu0 0.0
  %594 = vmatprep.subr.mxu0 0.0
  %595 = vmatpush1.msra.mxu0 0.0
  %596 = vmatprep.subr.mxu0 0.0
  %597 = vmatpush1.msra.mxu0 0.0
  %598 = vmatprep.subr.mxu0 0.0
  %599 = vmatpush1.msra.mxu0 0.0
  %600 = vmatprep.subr.mxu0 0.0
  %601 = vmatpush1.msra.mxu0 0.0
  %602 = vmatprep.subr.mxu0 0.0
  %603 = vmatpush1.msra.mxu0 0.0
  %604 = vmatprep.subr.mxu0 0.0
  %605 = vmatpush1.msra.mxu0 0.0
  %606 = vmatprep.subr.mxu0 0.0
  %607 = vmatpush1.msra.mxu0 0.0
  %608 = vmatprep.subr.mxu0 0.0
  %609 = vmatpush1.msra.mxu0 0.0
  %610 = vmatprep.subr.mxu0 0.0
  %611 = vmatpush1.msra.mxu0 0.0
  %612 = vmatprep.subr.mxu0 0.0
  %613 = vmatpush1.msra.mxu0 0.0
  %614 = vmatprep.subr.mxu0 0.0
  %615 = vmatpush1.msra.mxu0 0.0
  %616 = vmatprep.subr.mxu0 0.0
  %617 = vmatpush1.msra.mxu0 0.0
  %618 = vmatprep.subr.mxu0 0.0
  %619 = vmatpush1.msra.mxu0 0.0
  %620 = vmatprep.subr.mxu0 0.0
  %621 = vmatpush1.msra.mxu0 0.0
  %622 = vmatprep.subr.mxu0 0.0
  %623 = vmatpush1.msra.mxu0 0.0
  %624 = vmatprep.subr.mxu0 0.0
  %625 = vmatpush1.msra.mxu0 0.0
  %626 = vmatprep.subr.mxu0 0.0
  %627 = vmatpush1.msra.mxu0 0.0
  %628 = vmatprep.subr.mxu0 0.0
  %629 = vmatpush1.msra.mxu0 0.0
  %630 = vmatprep.subr.mxu0 0.0
  %631 = vmatpush1.msra.mxu0 0.0
  %632 = vmatprep.subr.mxu0 0.0
  %633 = vmatpush1.msra.mxu0 0.0
  %634 = vmatprep.subr.mxu0 0.0
  %635 = vmatpush1.msra.mxu0 0.0
  %636 = vmatprep.subr.mxu0 0.0
  %637 = vmatpush1.msra.mxu0 0.0
  %638 = vmatprep.subr.mxu0 0.0
  %639 = vmatpush1.msra.mxu0 0.0
  %640 = vmatprep.subr.mxu0 0.0
  %641 = vmatpush1.msra.mxu0 0.0
  %642 = vmatprep.subr.mxu0 0.0
  %643 = vmatpush1.msra.mxu0 0.0
  %644 = vmatprep.subr.mxu0 0.0
  %645 = vmatpush1.msra.mxu0 0.0
  %646 = vmatprep.mubr.f32.mxu0 0.0
  %647 = vmatmul.mubr.f32.gmra.mrb[0].mxu0 %v580
  %v648 = vpop.f32.mrb[0].mxu0
  %v649 = vadd.f32 %v151, %v648
  %v650 = vpop.f32.mrb[0].mxu0
  %651 = vdwg.mxu0
  %s652 = scalar_lea.vmem %s2, 8
  %653 = vst [vmem:[%s652] sm:$0xff] %v649
  %654 = vrot.lane.b32.xlu0 %v499, 16
  %v655 = vpop.permute.xlu0 %654
  %657 = vst.msk [vmem:[%s652] sm:$0xff] %vm404, %v655
  // Predicated region
  $region10: #{apply.1} parent=0 // pred_check
    _
  $region11: #{apply.1} parent=0 // pred_check_branch
    %659 = sbr.rel (0) target = $region13
  $region12: #{apply.1} parent=0 // pred_region
    _
  $region13: #{apply.1} parent=0 // pred_fallthru
    _
  // Predicated region
  $region14: #{apply.1} parent=0 // pred_check
    _
  $region15: #{apply.1} parent=0 // pred_check_branch
    %661 = sbr.rel (0) target = $region17
  $region16: #{apply.1} parent=0 // pred_region
    _
  $region17: #{apply.1} parent=0 // pred_fallthru
    _

</llo_original>
